<compile_context>
chip_gen: v7x
topology: tpu7x:2x2x1
jax: 0.10.0
libtpu: 0.0.40
codegen_flags: <defaults>
</compile_context>

<pallas_src>
import math
import functools

import jax
import jax.numpy as jnp
from jax import lax
from jax.experimental import pallas as pl
from jax.experimental.pallas import tpu as pltpu

FRACTION_BITS = 16
INTEGER_BITS = 16
_DELTA = 2.0 ** (-FRACTION_BITS)          # fixed-point grid step
_SCALE = 2.0 ** FRACTION_BITS             # 1 / delta
_BOUND = 2.0 ** (INTEGER_BITS - 1)
# quantization bounds with the delta folded out (integer-valued grid):
_QMIN = -_BOUND * _SCALE                  # == -2^31
_QMAX = (_BOUND - 1.0) * _SCALE           # == (2^15 - 1) * 2^16


def _round_to_fixed(x):
    # rounded = floor(x / delta) * delta ; clipped to [-2^15, 2^15 - 1]
    rounded = jnp.floor(x * _SCALE) * _DELTA
    return jnp.clip(rounded, -_BOUND, _BOUND - 1.0)


# ---------------------------------------------------------------------------
# Kernel: grid = (M tiles, K tiles); the f32 output tile is resident across
# the K axis and doubles as the accumulator (no scratch needed).
# ---------------------------------------------------------------------------
def conv_shift_kernel(patch_ref, v_ref, bias_ref, out_ref):
    x = patch_ref[...].astype(jnp.float32)
    # fixed-point quantization of the patches; the 2^-16 grid step is folded
    # into v in the wrapper, so only clip(floor(x * 2^16)) is needed here.
    xq = jnp.clip(jnp.floor(x * _SCALE), _QMIN, _QMAX)          # (TM, TK)
    acc = jnp.dot(xq, v_ref[...],
                  preferred_element_type=jnp.float32)           # (TM, Cout_p)

    kk = pl.program_id(1)

    @pl.when(kk == 0)
    def _init():
        out_ref[...] = acc + bias_ref[...]

    @pl.when(kk > 0)
    def _accumulate():
        out_ref[...] += acc


# ---------------------------------------------------------------------------
# Wrapper helpers
# ---------------------------------------------------------------------------
def _ceil_div(a, b):
    return -(-a // b)


def _round_up(x, m):
    return m * _ceil_div(x, m)


@functools.lru_cache(maxsize=1)
def _vmem_capacity_bytes():
    # Generation-aware budgets; fall back to the smallest (v7x: 64 MiB / TC).
    try:
        return int(pltpu.get_tpu_info().vmem_capacity_bytes)
    except Exception:
        return 64 << 20


def _extract_patches(x_nchw, kernel_size, stride, padding, dilation):
    """im2col via a single fused XLA op.

    Returns (N*OH*OW, Cin*KH*KW) with (Cin, KH, KW) channel-major feature
    ordering (matches the PyTorch (Cout, Cin, KH, KW) weight flattening),
    plus OH, OW.  precision=HIGHEST makes the identity-kernel gather
    bit-exact for f32 inputs.
    """
    kh, kw = kernel_size
    ph, pw = padding
    patches = lax.conv_general_dilated_patches(
        x_nchw,
        filter_shape=(kh, kw),
        window_strides=stride,
        padding=[(ph, ph), (pw, pw)],
        rhs_dilation=dilation,
        dimension_numbers=("NCHW", "OIHW", "NHWC"),
        precision=lax.Precision.HIGHEST)
    n, oh, ow, k = patches.shape
    return patches.reshape(n * oh * ow, k), oh, ow


def _select_tiles(m, k, cout_p, in_itemsize):
    """Pick (TM, TK, num K tiles, vmem_limit) from problem size + chip VMEM."""
    cap = _vmem_capacity_bytes()
    big_vmem = cap >= (100 << 20)                    # v5e / v6e (128 MiB) vs v7x (64 MiB)
    tile_budget = (20 << 20) if big_vmem else (8 << 20)

    # --- M tile: 256-aligned (fills the 256x256 MXU on v6e/v7x; v5e runs it as
    # 2x128 passes), capped at 512, and >= 6 tiles (>= 3 pipelined grid steps
    # per v7x TensorCore) whenever that keeps TM >= 256.  For small M the
    # MXU-fill constraint wins and we accept fewer grid steps.
    if m <= 256:
        tm = _round_up(max(m, 8), 8)
    elif m >= 6 * 512:
        tm = 512
    else:
        tm = 256
    while tm > 256 and 2 * 4 * tm * cout_p > tile_budget:
        tm -= 256

    # --- K tile: keep all of K resident if it fits; otherwise split K on a
    # 128-aligned grid axis and accumulate into the resident f32 output block
    # (never shrink TM below 256 because of large K).
    out_bytes = 2 * 4 * tm * cout_p                                 # double-buffered out tile
    k_floor = 2 * in_itemsize * tm * 128 + 2 * 4 * 128 * cout_p
    k_budget = max(tile_budget - out_bytes, k_floor)
    if 2 * in_itemsize * tm * k + 4 * k * cout_p <= k_budget:
        tk, n_k = k, 1
    else:
        per_k = 2 * in_itemsize * tm + 2 * 4 * cout_p               # patch + v, double-buffered
        tk_max = max(128, 128 * (k_budget // (per_k * 128)))
        n_k = _ceil_div(k, tk_max)
        tk = _round_up(_ceil_div(k, n_k), 128)
        n_k = _ceil_div(k, tk)

    # VMEM request: actual footprint + headroom, capped at capacity - 16 MiB
    # (=> 48 MiB on v7x, 112 MiB on v5e/v6e).
    v_bufs = 1 if n_k == 1 else 2
    need = (2 * in_itemsize * tm * tk + v_bufs * 4 * tk * cout_p
            + 2 * 4 * cout_p + 2 * 4 * tm * cout_p)
    vmem_limit = int(min(max(need + (4 << 20), 32 << 20), cap - (16 << 20)))
    return tm, tk, n_k, vmem_limit


def _maybe_single_buffered_spec(block_shape, index_map, resident):
    """Single-buffer resident (constant index) operands to halve their VMEM."""
    if resident:
        try:
            return pl.BlockSpec(block_shape, index_map,
                                pipeline_mode=pl.Buffered(buffer_count=1))
        except Exception:
            pass  # older builds without pipeline_mode: fall back to default
    return pl.BlockSpec(block_shape, index_map)


# ---------------------------------------------------------------------------
# Forward
# ---------------------------------------------------------------------------
@functools.partial(jax.jit, static_argnames=("stride", "padding", "dilation"))
def conv2d_shift_forward(x_nchw, shift, sign, bias=None,
                         stride=(1, 1), padding=(0, 0), dilation=(1, 1)):
    """Forward of Conv2dShift (use_kernel=False path; groups=1, 'zeros' pad)."""
    n, cin, _, _ = x_nchw.shape
    cout, _, kh, kw = shift.shape

    patches, oh, ow = _extract_patches(x_nchw, (kh, kw), stride, padding, dilation)
    m, k = patches.shape

    cout_p = _round_up(cout, 128)                     # lane-dense output stores
    tm, tk, n_k, vmem_limit = _select_tiles(m, k, cout_p, patches.dtype.itemsize)
    m_pad = _round_up(m, tm)
    k_pad = tk * n_k

    if m_pad != m or k_pad != k:
        patches = jnp.pad(patches, ((0, m_pad - m), (0, k_pad - k)))

    # ---- weights / bias built once in the wrapper (not per tile) -----------
    # v = 2^round(shift) * sign(round(clamp(sign,-1,1))); the 2^-16 fixed-point
    # grid step is folded in here so the kernel quantization drops a multiply.
    s = jnp.sign(jnp.round(jnp.clip(sign.astype(jnp.float32), -1.0, 1.0)))
    v = jnp.exp2(jnp.round(shift.astype(jnp.float32))) * s          # (Cout,Cin,KH,KW)
    v = v.reshape(cout, k).T * jnp.float32(_DELTA)                  # (K, Cout)
    if k_pad != k or cout_p != cout:
        v = jnp.pad(v, ((0, k_pad - k), (0, cout_p - cout)))

    if bias is None:
        bias_q = jnp.zeros((1, cout_p), jnp.float32)
    else:
        bias_q = _round_to_fixed(bias.astype(jnp.float32)).reshape(1, cout)
        if cout_p != cout:
            bias_q = jnp.pad(bias_q, ((0, 0), (0, cout_p - cout)))

    cost = pl.CostEstimate(
        flops=2 * m_pad * k_pad * cout_p,
        transcendentals=0,
        bytes_accessed=(patches.dtype.itemsize * m_pad * k_pad
                        + 4 * k_pad * cout_p + 4 * cout_p + 4 * m_pad * cout_p))

    out_flat = pl.pallas_call(
        conv_shift_kernel,
        out_shape=jax.ShapeDtypeStruct((m_pad, cout_p), jnp.float32),
        grid_spec=pltpu.PrefetchScalarGridSpec(
            num_scalar_prefetch=0,
            grid=(m_pad // tm, n_k),
            in_specs=[
                pl.BlockSpec((tm, tk), lambda i, kk: (i, kk)),        # patches
                _maybe_single_buffered_spec(                          # v
                    (tk, cout_p), lambda i, kk: (kk, 0), resident=(n_k == 1)),
                _maybe_single_buffered_spec(                          # bias
                    (1, cout_p), lambda i, kk: (0, 0), resident=True),
            ],
            out_specs=pl.BlockSpec((tm, cout_p), lambda i, kk: (i, 0)),
        ),
        compiler_params=pltpu.CompilerParams(
            dimension_semantics=("parallel", "arbitrary"),
            vmem_limit_bytes=vmem_limit),
        cost_estimate=cost,
    )(patches, v, bias_q)

    out = out_flat[:m, :cout].reshape(n, oh, ow, cout).transpose(0, 3, 1, 2)  # NCHW
    return out


# ---------------------------------------------------------------------------
# Reference + self-test
# ---------------------------------------------------------------------------
def _reference(x_nchw, shift, sign, bias, stride, padding, dilation):
    """Plain-JAX reference mirroring the PyTorch (use_kernel=False) path."""
    xq = _round_to_fixed(x_nchw)
    s = jnp.sign(jnp.round(jnp.clip(sign, -1.0, 1.0)))
    v = jnp.exp2(jnp.round(shift)) * s
    out = jax.lax.conv_general_dilated(
        xq, v, window_strides=stride,
        padding=[(padding[0], padding[0]), (padding[1], padding[1])],
        rhs_dilation=dilation,
        dimension_numbers=("NCHW", "OIHW", "NCHW"))
    if bias is not None:
        bq = _round_to_fixed(bias)
        out = out + bq.reshape(1, -1, 1, 1)
    return out


if __name__ == "__main__":
    # Conv2dShift(in_channels=4, out_channels=8, kernel_size=3,
    #             stride=1, padding=1, bias=True)
    N, CIN, H, W = 2, 4, 16, 16
    COUT, KH, KW = 8, 3, 3
    stride, padding, dilation = (1, 1), (1, 1), (1, 1)

    key = jax.random.PRNGKey(0)
    kx, ksh, ksg, kb = jax.random.split(key, 4)

    x = jax.random.normal(kx, (N, CIN, H, W), dtype=jnp.float32)

    # deterministic parameter init mirroring _ConvNdShift.reset_parameters()
    shift = jax.random.uniform(ksh, (COUT, CIN, KH, KW),
                               minval=-10.0, maxval=-1.0, dtype=jnp.float32)
    sign = jax.random.uniform(ksg, (COUT, CIN, KH, KW),
                              minval=-1.0, maxval=1.0, dtype=jnp.float32)
    fan_in = CIN * KH * KW
    bound = 1.0 / math.sqrt(fan_in)
    bias = jax.random.uniform(kb, (COUT,), minval=-bound, maxval=bound,
                              dtype=jnp.float32)

    out = conv2d_shift_forward(x, shift, sign, bias,
                               stride=stride, padding=padding,
                               dilation=dilation)
    out = jax.block_until_ready(out)

    ref = _reference(x, shift, sign, bias, stride, padding, dilation)
    assert out.shape == (N, COUT, H, W), out.shape
    assert jnp.allclose(out, ref, atol=1e-5, rtol=1e-5), \
        float(jnp.max(jnp.abs(out - ref)))

    # also exercise the bias=None path (PyTorch allows bias=False)
    out_nb = jax.block_until_ready(
        conv2d_shift_forward(x, shift, sign, None,
                             stride=stride, padding=padding,
                             dilation=dilation))
    ref_nb = _reference(x, shift, sign, None, stride, padding, dilation)
    assert jnp.allclose(out_nb, ref_nb, atol=1e-5, rtol=1e-5), \
        float(jnp.max(jnp.abs(out_nb - ref_nb)))

    print("KERNEL_OK")
</pallas_src>

<mosaic_0001>
module attributes {stable_mosaic.version = 11 : i64} {
  func.func @conv_shift_kernel(%arg0: i32, %arg1: i32, %arg2: memref<256x36xf32, #tpu.memory_space<vmem>>, %arg3: memref<36x128xf32, #tpu.memory_space<vmem>>, %arg4: memref<1x128xf32, #tpu.memory_space<vmem>>, %arg5: memref<256x128xf32, #tpu.memory_space<vmem>>) attributes {dimension_semantics = [#tpu.dimension_semantics<parallel>, #tpu.dimension_semantics<arbitrary>], iteration_bounds = array<i64: 2, 1>, scalar_prefetch = 0 : i64, scratch_operands = 0 : i64, tpu.core_type = #tpu.core_type<tc>, window_params = [{transform_indices = @transform_0, window_bounds = array<i64: 256, 36>}, {pipeline_mode = #tpu.pipeline_mode<synchronous>, transform_indices = @transform_1, window_bounds = array<i64: 36, 128>}, {pipeline_mode = #tpu.pipeline_mode<synchronous>, transform_indices = @transform_2, window_bounds = array<i64: 1, 128>}, {transform_indices = @transform_3, window_bounds = array<i64: 256, 128>}]} {
    %c0 = arith.constant 0 : index
    %c0_0 = arith.constant 0 : index
    %0 = vector.load %arg2[%c0, %c0_0] : memref<256x36xf32, #tpu.memory_space<vmem>>, vector<256x36xf32>
    %cst = arith.constant 6.553600e+04 : f32
    %1 = vector.broadcast %cst : f32 to vector<256x36xf32>
    %2 = arith.mulf %0, %1 : vector<256x36xf32>
    %3 = math.floor %2 : vector<256x36xf32>
    %cst_1 = arith.constant -2.14748365E+9 : f32
    %cst_2 = arith.constant 2.14741811E+9 : f32
    %4 = vector.broadcast %cst_1 : f32 to vector<256x36xf32>
    %5 = arith.maximumf %4, %3 : vector<256x36xf32>
    %6 = vector.broadcast %cst_2 : f32 to vector<256x36xf32>
    %7 = arith.minimumf %6, %5 : vector<256x36xf32>
    %c0_3 = arith.constant 0 : index
    %c0_4 = arith.constant 0 : index
    %8 = vector.load %arg3[%c0_3, %c0_4] : memref<36x128xf32, #tpu.memory_space<vmem>>, vector<36x128xf32>
    %cst_5 = arith.constant dense<0.000000e+00> : vector<256x128xf32>
    %9 = tpu.matmul %7, %8, %cst_5 {dimension_numbers = #tpu.dot_dimension_numbers<[1], [0], [0], [1], [0, 0, 1, 1], [], []>} : vector<256x36xf32>, vector<36x128xf32>, vector<256x128xf32> -> vector<256x128xf32>
    %c0_i32 = arith.constant 0 : i32
    %10 = arith.cmpi eq, %arg1, %c0_i32 : i32
    %11 = arith.extui %10 : i1 to i32
    %c0_i32_6 = arith.constant 0 : i32
    %12 = arith.cmpi ne, %11, %c0_i32_6 : i32
    scf.if %12 {
      %c0_9 = arith.constant 0 : index
      %c0_10 = arith.constant 0 : index
      %16 = vector.load %arg4[%c0_9, %c0_10] : memref<1x128xf32, #tpu.memory_space<vmem>>, vector<1x128xf32>
      %17 = vector.broadcast %16 : vector<1x128xf32> to vector<256x128xf32>
      %18 = arith.addf %9, %17 : vector<256x128xf32>
      %c0_11 = arith.constant 0 : index
      %c0_12 = arith.constant 0 : index
      %19 = vector.load %arg5[%c0_11, %c0_12] : memref<256x128xf32, #tpu.memory_space<vmem>>, vector<256x128xf32>
      tpu.vector_store %arg5[%c0_11, %c0_12], %18 {strides = array<i32>} : memref<256x128xf32, #tpu.memory_space<vmem>>, vector<256x128xf32>,
    } else {
    }
    %c0_i32_7 = arith.constant 0 : i32
    %13 = arith.cmpi sgt, %arg1, %c0_i32_7 : i32
    %14 = arith.extui %13 : i1 to i32
    %c0_i32_8 = arith.constant 0 : i32
    %15 = arith.cmpi ne, %14, %c0_i32_8 : i32
    scf.if %15 {
      %c0_9 = arith.constant 0 : index
      %c0_10 = arith.constant 0 : index
      %16 = vector.load %arg5[%c0_9, %c0_10] : memref<256x128xf32, #tpu.memory_space<vmem>>, vector<256x128xf32>
      %17 = arith.addf %16, %9 : vector<256x128xf32>
      %c0_11 = arith.constant 0 : index
      %c0_12 = arith.constant 0 : index
      %18 = vector.load %arg5[%c0_11, %c0_12] : memref<256x128xf32, #tpu.memory_space<vmem>>, vector<256x128xf32>
      tpu.vector_store %arg5[%c0_11, %c0_12], %17 {strides = array<i32>} : memref<256x128xf32, #tpu.memory_space<vmem>>, vector<256x128xf32>,
    } else {
    }
    return
  }
  func.func @transform_0(%arg0: i32, %arg1: i32) -> (i32, i32) {
    %c0_i32 = arith.constant 0 : i32
    return %arg0, %arg1 : i32, i32
  }
  func.func @transform_1(%arg0: i32, %arg1: i32) -> (i32, i32) {
    %c0_i32 = arith.constant 0 : i32
    %c0_i32_0 = arith.constant 0 : i32
    return %arg1, %c0_i32 : i32, i32
  }
  func.func @transform_2(%arg0: i32, %arg1: i32) -> (i32, i32) {
    %c0_i32 = arith.constant 0 : i32
    %c0_i32_0 = arith.constant 0 : i32
    %c0_i32_1 = arith.constant 0 : i32
    return %c0_i32, %c0_i32_0 : i32, i32
  }
  func.func @transform_3(%arg0: i32, %arg1: i32) -> (i32, i32) {
    %c0_i32 = arith.constant 0 : i32
    %c0_i32_0 = arith.constant 0 : i32
    return %arg0, %c0_i32 : i32, i32
  }
}

</mosaic_0001>

<llo_original>
// kernel: conv2d_shift_forward.1
$region0: #{conv2d_shift_forward.1}
  #allocation0 [shape = 'u32[]', space=smem, size = 0x4, offset = 0x4, fixed_abs, tag = 'smem constant byte address 0x4 - core index']
  #allocation1 [shape = 'u32[144,128]{1,0:T(1,128)}', space=vmem, size = 0x12000, scoped, tag = 'internal scratch']
  %s0 = inlined_call_operand.vmem [shape: f32[512,36], index: 0, kind: input, shape index: {}]
  %s1 = inlined_call_operand.vmem [shape: f32[36,128], index: 1, kind: input, shape index: {}]
  %s2 = inlined_call_operand.vmem [shape: f32[1,128], index: 2, kind: input, shape index: {}]
  %s3 = inlined_call_operand.vmem [shape: f32[512,128], index: 3, kind: output, shape index: {}]
  %s4 = sld [smem:[#allocation0]]
  $region53: #{conv2d_shift_forward.1} parent=0
    _
  %s6 = ssub.s32 1, %s4
  %s7 = scalar_select 0, %s6, %s4
  loop: start=0, step=1, limit=4
  $region2: #{conv2d_shift_forward.1} parent=0 // loop_pre_header
    _
  $region3: #{conv2d_shift_forward.1} parent=0 // loop_header
    %s9 = sphi 0, %s13
    %p10 = scmp.ge.s32.totalorder %s9, 4
    %s16 = sphi 0, %s28
    %s17 = sphi 0, %s24
    %s18 = sphi 0, %s16
    %s19 = sphi 0, %s17
    %s20 = sphi 0, %s18
    %s21 = sphi 0, %s19
    %s33 = sphi 0, %s35
    %s36 = sphi 0, %s33
    %s37 = sphi 0, %s36
    %s53 = sphi 0, %s37
    %s59 = sphi 0, %s61
    %s62 = sphi 0, %s59
    %s63 = sphi 0, %s62
    %s79 = sphi 0, %s63
    %s83 = sphi 0, %s83
    %s85 = sphi 0, %s83
    %s86 = sphi 0, %s85
    %s100 = sphi 0, %s86
    %s106 = sphi 0, %s108
    %s109 = sphi 0, %s106
    %s110 = sphi 0, %s109
    %s126 = sphi 0, %s110
  $region4: #{conv2d_shift_forward.1} parent=0 // loop_header_branch
    %12 = sbr.rel (%p10) target = $region8
  $region5: #{conv2d_shift_forward.1} parent=0 // loop_body
    %s14 = ssub.s32 %s9, 1
    %s15 = ssub.s32 %s9, 2
    %s22 = sadd.s32 1, %s17
    %p23 = scmp.ge.s32.totalorder %s22, 1
    %s24 = scalar_select %p23, 0, %s22
    %s25 = sadd.s32 1, %s16
    %s26 = scalar_select %p23, %s25, %s16
    %p27 = scmp.ge.s32.totalorder %s26, 2
    %s28 = scalar_select %p27, 0, %s26
    %s29 = ssub.s32 %s16, %s28
    %s30 = ssub.s32 %s17, %s24
    %s31 = sor.u32 %s29, %s30
    %p32 = scmp.eq.s32.totalorder %s31, 0
    %s34 = sadd.s32 %s33, 1
    %s35 = scalar_select %p32, %s33, %s34
    %p38 = pneg %p32
    %p39 = scmp.eq.s32.totalorder %s9, 1
    %p40 = por %p38, %p39
    %p41 = scmp.ne.s32.totalorder %s33, %s36
    %p42 = scmp.eq.s32.totalorder %s9, 0
    %p43 = por %p41, %p42
    %p44 = scmp.ne.s32.totalorder %s33, %s36
    %p45 = scmp.eq.s32.totalorder %s14, 1
    %p46 = por %p44, %p45
    %p47 = scmp.ne.s32.totalorder %s36, %s37
    %p48 = scmp.eq.s32.totalorder %s14, 0
    %p49 = por %p47, %p48
    %p50 = scmp.ne.s32.totalorder %s36, %s37
    %p51 = scmp.eq.s32.totalorder %s15, 1
    %p52 = por %p50, %p51
    %p54 = scmp.ne.s32.totalorder %s37, %s53
    %p55 = scmp.eq.s32.totalorder %s15, 0
    %p56 = por %p54, %p55
    %s57 = ssub.s32 %s17, %s24
    %p58 = scmp.eq.s32.totalorder %s57, 0
    %s60 = sadd.s32 %s59, 1
    %s61 = scalar_select %p58, %s59, %s60
    %p64 = pneg %p58
    %p65 = scmp.eq.s32.totalorder %s9, 1
    %p66 = por %p64, %p65
    %p67 = scmp.ne.s32.totalorder %s59, %s62
    %p68 = scmp.eq.s32.totalorder %s9, 0
    %p69 = por %p67, %p68
    %p70 = scmp.ne.s32.totalorder %s59, %s62
    %p71 = scmp.eq.s32.totalorder %s14, 1
    %p72 = por %p70, %p71
    %p73 = scmp.ne.s32.totalorder %s62, %s63
    %p74 = scmp.eq.s32.totalorder %s14, 0
    %p75 = por %p73, %p74
    %p76 = scmp.ne.s32.totalorder %s62, %s63
    %p77 = scmp.eq.s32.totalorder %s15, 1
    %p78 = por %p76, %p77
    %p80 = scmp.ne.s32.totalorder %s63, %s79
    %p81 = scmp.eq.s32.totalorder %s15, 0
    %p82 = por %p80, %p81
    %s84 = sadd.s32 %s83, 1
    %p87 = scmp.eq.s32.totalorder %s9, 1
    %p88 = scmp.ne.s32.totalorder %s83, %s85
    %p89 = scmp.eq.s32.totalorder %s9, 0
    %p90 = por %p88, %p89
    %p91 = scmp.ne.s32.totalorder %s83, %s85
    %p92 = scmp.eq.s32.totalorder %s14, 1
    %p93 = por %p91, %p92
    %p94 = scmp.ne.s32.totalorder %s85, %s86
    %p95 = scmp.eq.s32.totalorder %s14, 0
    %p96 = por %p94, %p95
    %p97 = scmp.ne.s32.totalorder %s85, %s86
    %p98 = scmp.eq.s32.totalorder %s15, 1
    %p99 = por %p97, %p98
    %p101 = scmp.ne.s32.totalorder %s86, %s100
    %p102 = scmp.eq.s32.totalorder %s15, 0
    %p103 = por %p101, %p102
    %s104 = ssub.s32 %s16, %s28
    %p105 = scmp.eq.s32.totalorder %s104, 0
    %s107 = sadd.s32 %s106, 1
    %s108 = scalar_select %p105, %s106, %s107
    %p111 = pneg %p105
    %p112 = scmp.eq.s32.totalorder %s9, 1
    %p113 = por %p111, %p112
    %p114 = scmp.ne.s32.totalorder %s106, %s109
    %p115 = scmp.eq.s32.totalorder %s9, 0
    %p116 = por %p114, %p115
    %p117 = scmp.ne.s32.totalorder %s106, %s109
    %p118 = scmp.eq.s32.totalorder %s14, 1
    %p119 = por %p117, %p118
    %p120 = scmp.ne.s32.totalorder %s109, %s110
    %p121 = scmp.eq.s32.totalorder %s14, 0
    %p122 = por %p120, %p121
    %p123 = scmp.ne.s32.totalorder %s109, %s110
    %p124 = scmp.eq.s32.totalorder %s15, 1
    %p125 = por %p123, %p124
    %p127 = scmp.ne.s32.totalorder %s110, %s126
    %p128 = scmp.eq.s32.totalorder %s15, 0
    %p129 = por %p127, %p128
    %p130 = scmp.le.s32.totalorder 1, %s9
    %p131 = scmp.lt.s32.totalorder %s9, 3
    %p132 = pnand %p130, %p131
    %p133 = pneg %p132
    // Predicated region
    $region9: #{conv2d_shift_forward.1} parent=5 // pred_check
      _
    $region10: #{conv2d_shift_forward.1} parent=5 // pred_check_branch
      %135 = sbr.rel (%p132) target = $region12
    $region11: #{conv2d_shift_forward.1} parent=5 // pred_region
      %s136 = ssub.s32 %s9, 1
      // Predicated region
      $region13: #{conv2d_shift_forward.1} parent=11 // pred_check
        %p137 = pneg %p75
      $region14: #{conv2d_shift_forward.1} parent=11 // pred_check_branch
        %139 = sbr.rel (%p137) target = $region16
      $region15: #{conv2d_shift_forward.1} parent=11 // pred_region
        %s140 = smul.u32 5, %s19
        %p141 = scmp.lt.s32.totalorder %s140, 4
        %s142 = scalar_select %p141, %s140, 4
        %s143 = smul.addr %s142, 8
        %s144 = scalar_lea.vmem %s1, %s143
        %s145 = smul.u32 5, %s19
      $region16: #{conv2d_shift_forward.1} parent=11 // pred_fallthru
        _
      // Predicated region
      $region17: #{conv2d_shift_forward.1} parent=11 // pred_check
        %p146 = pneg %p96
      $region18: #{conv2d_shift_forward.1} parent=11 // pred_check_branch
        %148 = sbr.rel (%p146) target = $region20
      $region19: #{conv2d_shift_forward.1} parent=11 // pred_region
        _
      $region20: #{conv2d_shift_forward.1} parent=11 // pred_fallthru
        _
    $region12: #{conv2d_shift_forward.1} parent=5 // pred_fallthru
      _
    %p149 = scmp.lt.s32.totalorder %s9, 2
    // Predicated region
    $region21: #{conv2d_shift_forward.1} parent=5 // pred_check
      %p150 = pneg %p149
    $region22: #{conv2d_shift_forward.1} parent=5 // pred_check_branch
      %152 = sbr.rel (%p150) target = $region24
    $region23: #{conv2d_shift_forward.1} parent=5 // pred_region
      // Predicated region
      $region25: #{conv2d_shift_forward.1} parent=23 // pred_check
        %p153 = pneg %p43
      $region26: #{conv2d_shift_forward.1} parent=23 // pred_check_branch
        %155 = sbr.rel (%p153) target = $region28
      $region27: #{conv2d_shift_forward.1} parent=23 // pred_region
        %s156 = smul.u32 32, %s16
        %p157 = scmp.lt.s32.totalorder %s156, 63
        %s158 = scalar_select %p157, %s156, 63
        %p159 = scmp.lt.s32.totalorder %s17, 0
        %s160 = scalar_select %p159, %s17, 0
        %s161 = sadd.s32 %s160, %s158
        %s162 = smul.addr %s161, 8
        %s163 = scalar_lea.vmem %s0, %s162
        %s164 = smul.u32 32, %s16
      $region28: #{conv2d_shift_forward.1} parent=23 // pred_fallthru
        _
    $region24: #{conv2d_shift_forward.1} parent=5 // pred_fallthru
      _
    %p165 = scmp.le.s32.totalorder 1, %s9
    %p166 = scmp.lt.s32.totalorder %s9, 3
    %p167 = pnand %p165, %p166
    %p168 = pneg %p167
    // Predicated region
    $region29: #{conv2d_shift_forward.1} parent=5 // pred_check
      _
    $region30: #{conv2d_shift_forward.1} parent=5 // pred_check_branch
      %170 = sbr.rel (%p167) target = $region32
    $region31: #{conv2d_shift_forward.1} parent=5 // pred_region
      %s171 = ssub.s32 %s9, 1
      %s172 = smul.u32 32, %s18
      %p173 = scmp.lt.s32.totalorder %s172, 63
      %s174 = scalar_select %p173, %s172, 63
      %p175 = scmp.lt.s32.totalorder %s19, 0
      %s176 = scalar_select %p175, %s19, 0
      %s177 = sadd.s32 %s176, %s174
      %s178 = smul.addr %s177, 8
      %s179 = scalar_lea.vmem %s0, %s178
      %p180 = pneg %p49
      %p181 = pneg %p46
      %s182 = smul.u32 5, %s19
      %p183 = scmp.lt.s32.totalorder %s182, 4
      %s184 = scalar_select %p183, %s182, 4
      %s185 = smul.addr %s184, 8
      %s186 = scalar_lea.vmem %s1, %s185
      %p187 = pneg %p75
      %p188 = pneg %p72
      %p189 = pneg %p96
      %p190 = pneg %p93
      %p191 = pneg %p122
      %p192 = pneg %p119
      %s193 = smul.u32 32, %s18
      %p194 = scmp.lt.s32.totalorder %s193, 63
      %s195 = scalar_select %p194, %s193, 63
      %s196 = smul.addr %s195, 8
      %s197 = scalar_lea.vmem %s3, %s196
      %s198 = smul.u32 32, %s18
      %p199 = scmp.lt.s32.totalorder %s198, 63
      %s200 = scalar_select %p199, %s198, 63
      %p201 = scmp.lt.s32.totalorder %s19, 0
      %s202 = scalar_select %p201, %s19, 0
      %s203 = sadd.s32 %s202, %s200
      %s204 = smul.addr %s203, 8
      %s205 = scalar_lea.vmem %s0, %s204
      %s206 = smul.u32 32, %s18
      %s207 = smul.u32 5, %s19
      %p208 = scmp.lt.s32.totalorder %s207, 4
      %s209 = scalar_select %p208, %s207, 4
      %s210 = smul.addr %s209, 8
      %s211 = scalar_lea.vmem %s1, %s210
      %s212 = smul.u32 5, %s19
      %s213 = smul.u32 32, %s18
      %p214 = scmp.lt.s32.totalorder %s213, 63
      %s215 = scalar_select %p214, %s213, 63
      %s216 = smul.addr %s215, 8
      %s217 = scalar_lea.vmem %s3, %s216
      %s218 = smul.u32 32, %s18
      %v219 = vld [vmem:[%s205] sm:$0xff]
      %v220 = vld [vmem:[%s205 + $0x8] sm:$0xff]
      %v221 = vld [vmem:[%s205 + $0x10] sm:$0xff]
      %v222 = vld [vmem:[%s205 + $0x18] sm:$0xff]
      %v223 = vld [vmem:[%s205 + $0x20] sm:$0xff]
      %v224 = vld [vmem:[%s205 + $0x28] sm:$0xff]
      %v225 = vld [vmem:[%s205 + $0x30] sm:$0xff]
      %v226 = vld [vmem:[%s205 + $0x38] sm:$0xff]
      %v227 = vld [vmem:[%s205 + $0x40] sm:$0xff]
      %v228 = vld [vmem:[%s205 + $0x48] sm:$0xff]
      %v229 = vld [vmem:[%s205 + $0x50] sm:$0xff]
      %v230 = vld [vmem:[%s205 + $0x58] sm:$0xff]
      %v231 = vld [vmem:[%s205 + $0x60] sm:$0xff]
      %v232 = vld [vmem:[%s205 + $0x68] sm:$0xff]
      %v233 = vld [vmem:[%s205 + $0x70] sm:$0xff]
      %v234 = vld [vmem:[%s205 + $0x78] sm:$0xff]
      %v235 = vld [vmem:[%s205 + $0x80] sm:$0xff]
      %v236 = vld [vmem:[%s205 + $0x88] sm:$0xff]
      %v237 = vld [vmem:[%s205 + $0x90] sm:$0xff]
      %v238 = vld [vmem:[%s205 + $0x98] sm:$0xff]
      %v239 = vld [vmem:[%s205 + $0xa0] sm:$0xff]
      %v240 = vld [vmem:[%s205 + $0xa8] sm:$0xff]
      %v241 = vld [vmem:[%s205 + $0xb0] sm:$0xff]
      %v242 = vld [vmem:[%s205 + $0xb8] sm:$0xff]
      %v243 = vld [vmem:[%s205 + $0xc0] sm:$0xff]
      %v244 = vld [vmem:[%s205 + $0xc8] sm:$0xff]
      %v245 = vld [vmem:[%s205 + $0xd0] sm:$0xff]
      %v246 = vld [vmem:[%s205 + $0xd8] sm:$0xff]
      %v247 = vld [vmem:[%s205 + $0xe0] sm:$0xff]
      %v248 = vld [vmem:[%s205 + $0xe8] sm:$0xff]
      %v249 = vld [vmem:[%s205 + $0xf0] sm:$0xff]
      %v250 = vld [vmem:[%s205 + $0xf8] sm:$0xff]
      %v251 = vmul.f32 %v219, 65536.0
      %v252 = vmul.f32 %v220, 65536.0
      %v253 = vmul.f32 %v221, 65536.0
      %v254 = vmul.f32 %v222, 65536.0
      %v255 = vmul.f32 %v223, 65536.0
      %v256 = vmul.f32 %v224, 65536.0
      %v257 = vmul.f32 %v225, 65536.0
      %v258 = vmul.f32 %v226, 65536.0
      %v259 = vmul.f32 %v227, 65536.0
      %v260 = vmul.f32 %v228, 65536.0
      %v261 = vmul.f32 %v229, 65536.0
      %v262 = vmul.f32 %v230, 65536.0
      %v263 = vmul.f32 %v231, 65536.0
      %v264 = vmul.f32 %v232, 65536.0
      %v265 = vmul.f32 %v233, 65536.0
      %v266 = vmul.f32 %v234, 65536.0
      %v267 = vmul.f32 %v235, 65536.0
      %v268 = vmul.f32 %v236, 65536.0
      %v269 = vmul.f32 %v237, 65536.0
      %v270 = vmul.f32 %v238, 65536.0
      %v271 = vmul.f32 %v239, 65536.0
      %v272 = vmul.f32 %v240, 65536.0
      %v273 = vmul.f32 %v241, 65536.0
      %v274 = vmul.f32 %v242, 65536.0
      %v275 = vmul.f32 %v243, 65536.0
      %v276 = vmul.f32 %v244, 65536.0
      %v277 = vmul.f32 %v245, 65536.0
      %v278 = vmul.f32 %v246, 65536.0
      %v279 = vmul.f32 %v247, 65536.0
      %v280 = vmul.f32 %v248, 65536.0
      %v281 = vmul.f32 %v249, 65536.0
      %v282 = vmul.f32 %v250, 65536.0
      %v283 = vfloor.f32 %v251
      %v284 = vfloor.f32 %v252
      %v285 = vfloor.f32 %v253
      %v286 = vfloor.f32 %v254
      %v287 = vfloor.f32 %v255
      %v288 = vfloor.f32 %v256
      %v289 = vfloor.f32 %v257
      %v290 = vfloor.f32 %v258
      %v291 = vfloor.f32 %v259
      %v292 = vfloor.f32 %v260
      %v293 = vfloor.f32 %v261
      %v294 = vfloor.f32 %v262
      %v295 = vfloor.f32 %v263
      %v296 = vfloor.f32 %v264
      %v297 = vfloor.f32 %v265
      %v298 = vfloor.f32 %v266
      %v299 = vfloor.f32 %v267
      %v300 = vfloor.f32 %v268
      %v301 = vfloor.f32 %v269
      %v302 = vfloor.f32 %v270
      %v303 = vfloor.f32 %v271
      %v304 = vfloor.f32 %v272
      %v305 = vfloor.f32 %v273
      %v306 = vfloor.f32 %v274
      %v307 = vfloor.f32 %v275
      %v308 = vfloor.f32 %v276
      %v309 = vfloor.f32 %v277
      %v310 = vfloor.f32 %v278
      %v311 = vfloor.f32 %v279
      %v312 = vfloor.f32 %v280
      %v313 = vfloor.f32 %v281
      %v314 = vfloor.f32 %v282
      %v315 = vmax.f32 %v283, -2.1474836e+09
      %v316 = vmax.f32 %v284, -2.1474836e+09
      %v317 = vmax.f32 %v285, -2.1474836e+09
      %v318 = vmax.f32 %v286, -2.1474836e+09
      %v319 = vmax.f32 %v287, -2.1474836e+09
      %v320 = vmax.f32 %v288, -2.1474836e+09
      %v321 = vmax.f32 %v289, -2.1474836e+09
      %v322 = vmax.f32 %v290, -2.1474836e+09
      %v323 = vmax.f32 %v291, -2.1474836e+09
      %v324 = vmax.f32 %v292, -2.1474836e+09
      %v325 = vmax.f32 %v293, -2.1474836e+09
      %v326 = vmax.f32 %v294, -2.1474836e+09
      %v327 = vmax.f32 %v295, -2.1474836e+09
      %v328 = vmax.f32 %v296, -2.1474836e+09
      %v329 = vmax.f32 %v297, -2.1474836e+09
      %v330 = vmax.f32 %v298, -2.1474836e+09
      %v331 = vmax.f32 %v299, -2.1474836e+09
      %v332 = vmax.f32 %v300, -2.1474836e+09
      %v333 = vmax.f32 %v301, -2.1474836e+09
      %v334 = vmax.f32 %v302, -2.1474836e+09
      %v335 = vmax.f32 %v303, -2.1474836e+09
      %v336 = vmax.f32 %v304, -2.1474836e+09
      %v337 = vmax.f32 %v305, -2.1474836e+09
      %v338 = vmax.f32 %v306, -2.1474836e+09
      %v339 = vmax.f32 %v307, -2.1474836e+09
      %v340 = vmax.f32 %v308, -2.1474836e+09
      %v341 = vmax.f32 %v309, -2.1474836e+09
      %v342 = vmax.f32 %v310, -2.1474836e+09
      %v343 = vmax.f32 %v311, -2.1474836e+09
      %v344 = vmax.f32 %v312, -2.1474836e+09
      %v345 = vmax.f32 %v313, -2.1474836e+09
      %v346 = vmax.f32 %v314, -2.1474836e+09
      %v347 = vmin.f32 %v315, 2.1474181e+09
      %v348 = vmin.f32 %v316, 2.1474181e+09
      %v349 = vmin.f32 %v317, 2.1474181e+09
      %v350 = vmin.f32 %v318, 2.1474181e+09
      %v351 = vmin.f32 %v319, 2.1474181e+09
      %v352 = vmin.f32 %v320, 2.1474181e+09
      %v353 = vmin.f32 %v321, 2.1474181e+09
      %v354 = vmin.f32 %v322, 2.1474181e+09
      %v355 = vmin.f32 %v323, 2.1474181e+09
      %v356 = vmin.f32 %v324, 2.1474181e+09
      %v357 = vmin.f32 %v325, 2.1474181e+09
      %v358 = vmin.f32 %v326, 2.1474181e+09
      %v359 = vmin.f32 %v327, 2.1474181e+09
      %v360 = vmin.f32 %v328, 2.1474181e+09
      %v361 = vmin.f32 %v329, 2.1474181e+09
      %v362 = vmin.f32 %v330, 2.1474181e+09
      %v363 = vmin.f32 %v331, 2.1474181e+09
      %v364 = vmin.f32 %v332, 2.1474181e+09
      %v365 = vmin.f32 %v333, 2.1474181e+09
      %v366 = vmin.f32 %v334, 2.1474181e+09
      %v367 = vmin.f32 %v335, 2.1474181e+09
      %v368 = vmin.f32 %v336, 2.1474181e+09
      %v369 = vmin.f32 %v337, 2.1474181e+09
      %v370 = vmin.f32 %v338, 2.1474181e+09
      %v371 = vmin.f32 %v339, 2.1474181e+09
      %v372 = vmin.f32 %v340, 2.1474181e+09
      %v373 = vmin.f32 %v341, 2.1474181e+09
      %v374 = vmin.f32 %v342, 2.1474181e+09
      %v375 = vmin.f32 %v343, 2.1474181e+09
      %v376 = vmin.f32 %v344, 2.1474181e+09
      %v377 = vmin.f32 %v345, 2.1474181e+09
      %v378 = vmin.f32 %v346, 2.1474181e+09
      %v379 = vld [vmem:[%s211] sm:$0xff]
      %v380 = vld [vmem:[%s211 + $0x8] sm:$0xff]
      %v381 = vld [vmem:[%s211 + $0x10] sm:$0xff]
      %v382 = vld [vmem:[%s211 + $0x18] sm:$0xff]
      %v383 = vld [vmem:[%s211 + $0x20] sm:$0xf]
      %vm384 = vcmask 293888
      %v386 = vsel %vm384, %v347, 0
      %v389 = vsel %vm384, %v348, 0
      %v392 = vsel %vm384, %v349, 0
      %v395 = vsel %vm384, %v350, 0
      %v398 = vsel %vm384, %v351, 0
      %v401 = vsel %vm384, %v352, 0
      %v404 = vsel %vm384, %v353, 0
      %v407 = vsel %vm384, %v354, 0
      %v410 = vsel %vm384, %v355, 0
      %v413 = vsel %vm384, %v356, 0
      %v416 = vsel %vm384, %v357, 0
      %v419 = vsel %vm384, %v358, 0
      %v422 = vsel %vm384, %v359, 0
      %v425 = vsel %vm384, %v360, 0
      %v428 = vsel %vm384, %v361, 0
      %v431 = vsel %vm384, %v362, 0
      %v434 = vsel %vm384, %v363, 0
      %v437 = vsel %vm384, %v364, 0
      %v440 = vsel %vm384, %v365, 0
      %v443 = vsel %vm384, %v366, 0
      %v446 = vsel %vm384, %v367, 0
      %v449 = vsel %vm384, %v368, 0
      %v452 = vsel %vm384, %v369, 0
      %v455 = vsel %vm384, %v370, 0
      %v458 = vsel %vm384, %v371, 0
      %v461 = vsel %vm384, %v372, 0
      %v464 = vsel %vm384, %v373, 0
      %v467 = vsel %vm384, %v374, 0
      %v470 = vsel %vm384, %v375, 0
      %v473 = vsel %vm384, %v376, 0
      %v476 = vsel %vm384, %v377, 0
      %v479 = vsel %vm384, %v378, 0
      %vm481 = vcmask 1043456
      %v483 = vsel %vm481, %v383, 0
      %485 = vmatprep.subr.mxu0 0.0
      %486 = vmatpush1.msra.mxu0 %v379
      %487 = vmatprep.subr.mxu0 0.0
      %488 = vmatpush1.msra.mxu0 %v380
      %489 = vmatprep.subr.mxu0 0.0
      %490 = vmatpush1.msra.mxu0 %v381
      %491 = vmatprep.subr.mxu0 0.0
      %492 = vmatpush1.msra.mxu0 %v382
      %493 = vmatprep.subr.mxu0 0.0
      %494 = vmatpush1.msra.mxu0 %v483
      %495 = vmatprep.subr.mxu0 0.0
      %496 = vmatpush1.msra.mxu0 0.0
      %497 = vmatprep.subr.mxu0 0.0
      %498 = vmatpush1.msra.mxu0 0.0
      %499 = vmatprep.subr.mxu0 0.0
      %500 = vmatpush1.msra.mxu0 0.0
      %501 = vmatprep.subr.mxu0 0.0
      %502 = vmatpush1.msra.mxu0 0.0
      %503 = vmatprep.subr.mxu0 0.0
      %504 = vmatpush1.msra.mxu0 0.0
      %505 = vmatprep.subr.mxu0 0.0
      %506 = vmatpush1.msra.mxu0 0.0
      %507 = vmatprep.subr.mxu0 0.0
      %508 = vmatpush1.msra.mxu0 0.0
      %509 = vmatprep.subr.mxu0 0.0
      %510 = vmatpush1.msra.mxu0 0.0
      %511 = vmatprep.subr.mxu0 0.0
      %512 = vmatpush1.msra.mxu0 0.0
      %513 = vmatprep.subr.mxu0 0.0
      %514 = vmatpush1.msra.mxu0 0.0
      %515 = vmatprep.subr.mxu0 0.0
      %516 = vmatpush1.msra.mxu0 0.0
      %517 = vmatprep.subr.mxu0 0.0
      %518 = vmatpush1.msra.mxu0 0.0
      %519 = vmatprep.subr.mxu0 0.0
      %520 = vmatpush1.msra.mxu0 0.0
      %521 = vmatprep.subr.mxu0 0.0
      %522 = vmatpush1.msra.mxu0 0.0
      %523 = vmatprep.subr.mxu0 0.0
      %524 = vmatpush1.msra.mxu0 0.0
      %525 = vmatprep.subr.mxu0 0.0
      %526 = vmatpush1.msra.mxu0 0.0
      %527 = vmatprep.subr.mxu0 0.0
      %528 = vmatpush1.msra.mxu0 0.0
      %529 = vmatprep.subr.mxu0 0.0
      %530 = vmatpush1.msra.mxu0 0.0
      %531 = vmatprep.subr.mxu0 0.0
      %532 = vmatpush1.msra.mxu0 0.0
      %533 = vmatprep.subr.mxu0 0.0
      %534 = vmatpush1.msra.mxu0 0.0
      %535 = vmatprep.subr.mxu0 0.0
      %536 = vmatpush1.msra.mxu0 0.0
      %537 = vmatprep.subr.mxu0 0.0
      %538 = vmatpush1.msra.mxu0 0.0
      %539 = vmatprep.subr.mxu0 0.0
      %540 = vmatpush1.msra.mxu0 0.0
      %541 = vmatprep.subr.mxu0 0.0
      %542 = vmatpush1.msra.mxu0 0.0
      %543 = vmatprep.subr.mxu0 0.0
      %544 = vmatpush1.msra.mxu0 0.0
      %545 = vmatprep.subr.mxu0 0.0
      %546 = vmatpush1.msra.mxu0 0.0
      %547 = vmatprep.subr.mxu0 0.0
      %548 = vmatpush1.msra.mxu0 0.0
      %549 = vmatprep.mubr.f32.mxu0 0.0
      %550 = vmatmul.mubr.f32.gmra.mrb[0].mxu0 %v386
      %v551 = vpop.f32.mrb[0].mxu0
      %v552 = vadd.f32 0.0, %v551
      %v553 = vpop.f32.mrb[0].mxu0
      %554 = vmatprep.mubr.f32.mxu0 0.0
      %555 = vmatmul.mubr.f32.gmra.mrb[0].mxu0 %v389
      %v556 = vpop.f32.mrb[0].mxu0
      %v557 = vadd.f32 0.0, %v556
      %v558 = vpop.f32.mrb[0].mxu0
      %559 = vmatprep.mubr.f32.mxu0 0.0
      %560 = vmatmul.mubr.f32.gmra.mrb[0].mxu0 %v392
      %v561 = vpop.f32.mrb[0].mxu0
      %v562 = vadd.f32 0.0, %v561
      %v563 = vpop.f32.mrb[0].mxu0
      %564 = vmatprep.mubr.f32.mxu0 0.0
      %565 = vmatmul.mubr.f32.gmra.mrb[0].mxu0 %v395
      %v566 = vpop.f32.mrb[0].mxu0
      %v567 = vadd.f32 0.0, %v566
      %v568 = vpop.f32.mrb[0].mxu0
      %569 = vmatprep.mubr.f32.mxu0 0.0
      %570 = vmatmul.mubr.f32.gmra.mrb[0].mxu0 %v398
      %v571 = vpop.f32.mrb[0].mxu0
      %v572 = vadd.f32 0.0, %v571
      %v573 = vpop.f32.mrb[0].mxu0
      %574 = vmatprep.mubr.f32.mxu0 0.0
      %575 = vmatmul.mubr.f32.gmra.mrb[0].mxu0 %v401
      %v576 = vpop.f32.mrb[0].mxu0
      %v577 = vadd.f32 0.0, %v576
      %v578 = vpop.f32.mrb[0].mxu0
      %579 = vmatprep.mubr.f32.mxu0 0.0
      %580 = vmatmul.mubr.f32.gmra.mrb[0].mxu0 %v404
      %v581 = vpop.f32.mrb[0].mxu0
      %v582 = vadd.f32 0.0, %v581
      %v583 = vpop.f32.mrb[0].mxu0
      %584 = vmatprep.mubr.f32.mxu0 0.0
      %585 = vmatmul.mubr.f32.gmra.mrb[0].mxu0 %v407
      %v586 = vpop.f32.mrb[0].mxu0
      %v587 = vadd.f32 0.0, %v586
      %v588 = vpop.f32.mrb[0].mxu0
      %589 = vmatprep.mubr.f32.mxu0 0.0
      %590 = vmatmul.mubr.f32.gmra.mrb[0].mxu0 %v410
      %v591 = vpop.f32.mrb[0].mxu0
      %v592 = vadd.f32 0.0, %v591
      %v593 = vpop.f32.mrb[0].mxu0
      %594 = vmatprep.mubr.f32.mxu0 0.0
      %595 = vmatmul.mubr.f32.gmra.mrb[0].mxu0 %v413
      %v596 = vpop.f32.mrb[0].mxu0
      %v597 = vadd.f32 0.0, %v596
      %v598 = vpop.f32.mrb[0].mxu0
      %599 = vmatprep.mubr.f32.mxu0 0.0
      %600 = vmatmul.mubr.f32.gmra.mrb[0].mxu0 %v416
      %v601 = vpop.f32.mrb[0].mxu0
      %v602 = vadd.f32 0.0, %v601
      %v603 = vpop.f32.mrb[0].mxu0
      %604 = vmatprep.mubr.f32.mxu0 0.0
      %605 = vmatmul.mubr.f32.gmra.mrb[0].mxu0 %v419
      %v606 = vpop.f32.mrb[0].mxu0
      %v607 = vadd.f32 0.0, %v606
      %v608 = vpop.f32.mrb[0].mxu0
      %609 = vmatprep.mubr.f32.mxu0 0.0
      %610 = vmatmul.mubr.f32.gmra.mrb[0].mxu0 %v422
      %v611 = vpop.f32.mrb[0].mxu0
      %v612 = vadd.f32 0.0, %v611
      %v613 = vpop.f32.mrb[0].mxu0
      %614 = vmatprep.mubr.f32.mxu0 0.0
      %615 = vmatmul.mubr.f32.gmra.mrb[0].mxu0 %v425
      %v616 = vpop.f32.mrb[0].mxu0
      %v617 = vadd.f32 0.0, %v616
      %v618 = vpop.f32.mrb[0].mxu0
      %619 = vmatprep.mubr.f32.mxu0 0.0
      %620 = vmatmul.mubr.f32.gmra.mrb[0].mxu0 %v428
      %v621 = vpop.f32.mrb[0].mxu0
      %v622 = vadd.f32 0.0, %v621
      %v623 = vpop.f32.mrb[0].mxu0
      %624 = vmatprep.mubr.f32.mxu0 0.0
      %625 = vmatmul.mubr.f32.gmra.mrb[0].mxu0 %v431
      %v626 = vpop.f32.mrb[0].mxu0
      %v627 = vadd.f32 0.0, %v626
      %v628 = vpop.f32.mrb[0].mxu0
      %629 = vmatprep.mubr.f32.mxu0 0.0
      %630 = vmatmul.mubr.f32.gmra.mrb[0].mxu0 %v434
      %v631 = vpop.f32.mrb[0].mxu0
      %v632 = vadd.f32 0.0, %v631
      %v633 = vpop.f32.mrb[0].mxu0
      %634 = vmatprep.mubr.f32.mxu0 0.0
      %635 = vmatmul.mubr.f32.gmra.mrb[0].mxu0 %v437
      %v636 = vpop.f32.mrb[0].mxu0
      %v637 = vadd.f32 0.0, %v636
      %v638 = vpop.f32.mrb[0].mxu0
      %639 = vmatprep.mubr.f32.mxu0 0.0
      %640 = vmatmul.mubr.f32.gmra.mrb[0].mxu0 %v440
      %v641 = vpop.f32.mrb[0].mxu0
      %v642 = vadd.f32 0.0, %v641
      %v643 = vpop.f32.mrb[0].mxu0
      %644 = vmatprep.mubr.f32.mxu0 0.0
      %645 = vmatmul.mubr.f32.gmra.mrb[0].mxu0 %v443
      %v646 = vpop.f32.mrb[0].mxu0
      %v647 = vadd.f32 0.0, %v646
      %v648 = vpop.f32.mrb[0].mxu0
      %649 = vmatprep.mubr.f32.mxu0 0.0
      %650 = vmatmul.mubr.f32.gmra.mrb[0].mxu0 %v446
      %v651 = vpop.f32.mrb[0].mxu0
      %v652 = vadd.f32 0.0, %v651
      %v653 = vpop.f32.mrb[0].mxu0
      %654 = vmatprep.mubr.f32.mxu0 0.0
      %655 = vmatmul.mubr.f32.gmra.mrb[0].mxu0 %v449
      %v656 = vpop.f32.mrb[0].mxu0
      %v657 = vadd.f32 0.0, %v656
      %v658 = vpop.f32.mrb[0].mxu0
      %659 = vmatprep.mubr.f32.mxu0 0.0
      %660 = vmatmul.mubr.f32.gmra.mrb[0].mxu0 %v452
      %v661 = vpop.f32.mrb[0].mxu0
      %v662 = vadd.f32 0.0, %v661
      %v663 = vpop.f32.mrb[0].mxu0
      %664 = vmatprep.mubr.f32.mxu0 0.0
      %665 = vmatmul.mubr.f32.gmra.mrb[0].mxu0 %v455
      %v666 = vpop.f32.mrb[0].mxu0
      %v667 = vadd.f32 0.0, %v666
      %v668 = vpop.f32.mrb[0].mxu0
      %669 = vmatprep.mubr.f32.mxu0 0.0
      %670 = vmatmul.mubr.f32.gmra.mrb[0].mxu0 %v458
      %v671 = vpop.f32.mrb[0].mxu0
      %v672 = vadd.f32 0.0, %v671
      %v673 = vpop.f32.mrb[0].mxu0
      %674 = vmatprep.mubr.f32.mxu0 0.0
      %675 = vmatmul.mubr.f32.gmra.mrb[0].mxu0 %v461
      %v676 = vpop.f32.mrb[0].mxu0
      %v677 = vadd.f32 0.0, %v676
      %v678 = vpop.f32.mrb[0].mxu0
      %679 = vmatprep.mubr.f32.mxu0 0.0
      %680 = vmatmul.mubr.f32.gmra.mrb[0].mxu0 %v464
      %v681 = vpop.f32.mrb[0].mxu0
      %v682 = vadd.f32 0.0, %v681
      %v683 = vpop.f32.mrb[0].mxu0
      %684 = vmatprep.mubr.f32.mxu0 0.0
      %685 = vmatmul.mubr.f32.gmra.mrb[0].mxu0 %v467
      %v686 = vpop.f32.mrb[0].mxu0
      %v687 = vadd.f32 0.0, %v686
      %v688 = vpop.f32.mrb[0].mxu0
      %689 = vmatprep.mubr.f32.mxu0 0.0
      %690 = vmatmul.mubr.f32.gmra.mrb[0].mxu0 %v470
      %v691 = vpop.f32.mrb[0].mxu0
      %v692 = vadd.f32 0.0, %v691
      %v693 = vpop.f32.mrb[0].mxu0
      %694 = vmatprep.mubr.f32.mxu0 0.0
      %695 = vmatmul.mubr.f32.gmra.mrb[0].mxu0 %v473
      %v696 = vpop.f32.mrb[0].mxu0
      %v697 = vadd.f32 0.0, %v696
      %v698 = vpop.f32.mrb[0].mxu0
      %699 = vmatprep.mubr.f32.mxu0 0.0
      %700 = vmatmul.mubr.f32.gmra.mrb[0].mxu0 %v476
      %v701 = vpop.f32.mrb[0].mxu0
      %v702 = vadd.f32 0.0, %v701
      %v703 = vpop.f32.mrb[0].mxu0
      %704 = vmatprep.mubr.f32.mxu0 0.0
      %705 = vmatmul.mubr.f32.gmra.mrb[0].mxu0 %v479
      %v706 = vpop.f32.mrb[0].mxu0
      %v707 = vadd.f32 0.0, %v706
      %v708 = vpop.f32.mrb[0].mxu0
      %709 = vdwg.mxu0
      %p710 = scmp.eq.s32.totalorder %s19, 0
      // Predicated region
      $region33: #{conv2d_shift_forward.1} parent=31 // pred_check
        %p711 = pneg %p710
      $region34: #{conv2d_shift_forward.1} parent=31 // pred_check_branch
        %713 = sbr.rel (%p711) target = $region36
      $region35: #{conv2d_shift_forward.1} parent=31 // pred_region
        %v714 = vld [vmem:[%s2] sm:$0x1]
        %v716 = vlaneseq
        %v717 = vshrl.u32 %v716, 7
        %v718 = vsub.s32 0, %v717
        %v719 = vrot.slane %v714, %v718
        %v721 = vadd.f32 %v552, %v719
        %v722 = vadd.f32 %v557, %v719
        %v723 = vadd.f32 %v562, %v719
        %v724 = vadd.f32 %v567, %v719
        %v725 = vadd.f32 %v572, %v719
        %v726 = vadd.f32 %v577, %v719
        %v727 = vadd.f32 %v582, %v719
        %v728 = vadd.f32 %v587, %v719
        %v729 = vadd.f32 %v592, %v719
        %v730 = vadd.f32 %v597, %v719
        %v731 = vadd.f32 %v602, %v719
        %v732 = vadd.f32 %v607, %v719
        %v733 = vadd.f32 %v612, %v719
        %v734 = vadd.f32 %v617, %v719
        %v735 = vadd.f32 %v622, %v719
        %v736 = vadd.f32 %v627, %v719
        %v737 = vadd.f32 %v632, %v719
        %v738 = vadd.f32 %v637, %v719
        %v739 = vadd.f32 %v642, %v719
        %v740 = vadd.f32 %v647, %v719
        %v741 = vadd.f32 %v652, %v719
        %v742 = vadd.f32 %v657, %v719
        %v743 = vadd.f32 %v662, %v719
        %v744 = vadd.f32 %v667, %v719
        %v745 = vadd.f32 %v672, %v719
        %v746 = vadd.f32 %v677, %v719
        %v747 = vadd.f32 %v682, %v719
        %v748 = vadd.f32 %v687, %v719
        %v749 = vadd.f32 %v692, %v719
        %v750 = vadd.f32 %v697, %v719
        %v751 = vadd.f32 %v702, %v719
        %v752 = vadd.f32 %v707, %v719
        %753 = vst [vmem:[%s217] sm:$0xff] %v721
        %754 = vst [vmem:[%s217 + $0x8] sm:$0xff] %v722
        %755 = vst [vmem:[%s217 + $0x10] sm:$0xff] %v723
        %756 = vst [vmem:[%s217 + $0x18] sm:$0xff] %v724
        %757 = vst [vmem:[%s217 + $0x20] sm:$0xff] %v725
        %758 = vst [vmem:[%s217 + $0x28] sm:$0xff] %v726
        %759 = vst [vmem:[%s217 + $0x30] sm:$0xff] %v727
        %760 = vst [vmem:[%s217 + $0x38] sm:$0xff] %v728
        %761 = vst [vmem:[%s217 + $0x40] sm:$0xff] %v729
        %762 = vst [vmem:[%s217 + $0x48] sm:$0xff] %v730
        %763 = vst [vmem:[%s217 + $0x50] sm:$0xff] %v731
        %764 = vst [vmem:[%s217 + $0x58] sm:$0xff] %v732
        %765 = vst [vmem:[%s217 + $0x60] sm:$0xff] %v733
        %766 = vst [vmem:[%s217 + $0x68] sm:$0xff] %v734
        %767 = vst [vmem:[%s217 + $0x70] sm:$0xff] %v735
        %768 = vst [vmem:[%s217 + $0x78] sm:$0xff] %v736
        %769 = vst [vmem:[%s217 + $0x80] sm:$0xff] %v737
        %770 = vst [vmem:[%s217 + $0x88] sm:$0xff] %v738
        %771 = vst [vmem:[%s217 + $0x90] sm:$0xff] %v739
        %772 = vst [vmem:[%s217 + $0x98] sm:$0xff] %v740
        %773 = vst [vmem:[%s217 + $0xa0] sm:$0xff] %v741
        %774 = vst [vmem:[%s217 + $0xa8] sm:$0xff] %v742
        %775 = vst [vmem:[%s217 + $0xb0] sm:$0xff] %v743
        %776 = vst [vmem:[%s217 + $0xb8] sm:$0xff] %v744
        %777 = vst [vmem:[%s217 + $0xc0] sm:$0xff] %v745
        %778 = vst [vmem:[%s217 + $0xc8] sm:$0xff] %v746
        %779 = vst [vmem:[%s217 + $0xd0] sm:$0xff] %v747
        %780 = vst [vmem:[%s217 + $0xd8] sm:$0xff] %v748
        %781 = vst [vmem:[%s217 + $0xe0] sm:$0xff] %v749
        %782 = vst [vmem:[%s217 + $0xe8] sm:$0xff] %v750
        %783 = vst [vmem:[%s217 + $0xf0] sm:$0xff] %v751
        %784 = vst [vmem:[%s217 + $0xf8] sm:$0xff] %v752
      $region36: #{conv2d_shift_forward.1} parent=31 // pred_fallthru
        _
      %p785 = scmp.gt.s32.totalorder %s19, 0
      // Predicated region
      $region37: #{conv2d_shift_forward.1} parent=31 // pred_check
        %p786 = pneg %p785
      $region38: #{conv2d_shift_forward.1} parent=31 // pred_check_branch
        %788 = sbr.rel (%p786) target = $region40
      $region39: #{conv2d_shift_forward.1} parent=31 // pred_region
        %v789 = vld [vmem:[%s217] sm:$0xff]
        %v790 = vld [vmem:[%s217 + $0x8] sm:$0xff]
        %v791 = vld [vmem:[%s217 + $0x10] sm:$0xff]
        %v792 = vld [vmem:[%s217 + $0x18] sm:$0xff]
        %v793 = vld [vmem:[%s217 + $0x20] sm:$0xff]
        %v794 = vld [vmem:[%s217 + $0x28] sm:$0xff]
        %v795 = vld [vmem:[%s217 + $0x30] sm:$0xff]
        %v796 = vld [vmem:[%s217 + $0x38] sm:$0xff]
        %v797 = vld [vmem:[%s217 + $0x40] sm:$0xff]
        %v798 = vld [vmem:[%s217 + $0x48] sm:$0xff]
        %v799 = vld [vmem:[%s217 + $0x50] sm:$0xff]
        %v800 = vld [vmem:[%s217 + $0x58] sm:$0xff]
        %v801 = vld [vmem:[%s217 + $0x60] sm:$0xff]
        %v802 = vld [vmem:[%s217 + $0x68] sm:$0xff]
        %v803 = vld [vmem:[%s217 + $0x70] sm:$0xff]
        %v804 = vld [vmem:[%s217 + $0x78] sm:$0xff]
        %v805 = vld [vmem:[%s217 + $0x80] sm:$0xff]
        %v806 = vld [vmem:[%s217 + $0x88] sm:$0xff]
        %v807 = vld [vmem:[%s217 + $0x90] sm:$0xff]
        %v808 = vld [vmem:[%s217 + $0x98] sm:$0xff]
        %v809 = vld [vmem:[%s217 + $0xa0] sm:$0xff]
        %v810 = vld [vmem:[%s217 + $0xa8] sm:$0xff]
        %v811 = vld [vmem:[%s217 + $0xb0] sm:$0xff]
        %v812 = vld [vmem:[%s217 + $0xb8] sm:$0xff]
        %v813 = vld [vmem:[%s217 + $0xc0] sm:$0xff]
        %v814 = vld [vmem:[%s217 + $0xc8] sm:$0xff]
        %v815 = vld [vmem:[%s217 + $0xd0] sm:$0xff]
        %v816 = vld [vmem:[%s217 + $0xd8] sm:$0xff]
        %v817 = vld [vmem:[%s217 + $0xe0] sm:$0xff]
        %v818 = vld [vmem:[%s217 + $0xe8] sm:$0xff]
        %v819 = vld [vmem:[%s217 + $0xf0] sm:$0xff]
        %v820 = vld [vmem:[%s217 + $0xf8] sm:$0xff]
        %v821 = vadd.f32 %v789, %v552
        %v822 = vadd.f32 %v790, %v557
        %v823 = vadd.f32 %v791, %v562
        %v824 = vadd.f32 %v792, %v567
        %v825 = vadd.f32 %v793, %v572
        %v826 = vadd.f32 %v794, %v577
        %v827 = vadd.f32 %v795, %v582
        %v828 = vadd.f32 %v796, %v587
        %v829 = vadd.f32 %v797, %v592
        %v830 = vadd.f32 %v798, %v597
        %v831 = vadd.f32 %v799, %v602
        %v832 = vadd.f32 %v800, %v607
        %v833 = vadd.f32 %v801, %v612
        %v834 = vadd.f32 %v802, %v617
        %v835 = vadd.f32 %v803, %v622
        %v836 = vadd.f32 %v804, %v627
        %v837 = vadd.f32 %v805, %v632
        %v838 = vadd.f32 %v806, %v637
        %v839 = vadd.f32 %v807, %v642
        %v840 = vadd.f32 %v808, %v647
        %v841 = vadd.f32 %v809, %v652
        %v842 = vadd.f32 %v810, %v657
        %v843 = vadd.f32 %v811, %v662
        %v844 = vadd.f32 %v812, %v667
        %v845 = vadd.f32 %v813, %v672
        %v846 = vadd.f32 %v814, %v677
        %v847 = vadd.f32 %v815, %v682
        %v848 = vadd.f32 %v816, %v687
        %v849 = vadd.f32 %v817, %v692
        %v850 = vadd.f32 %v818, %v697
        %v851 = vadd.f32 %v819, %v702
        %v852 = vadd.f32 %v820, %v707
        %853 = vst [vmem:[%s217] sm:$0xff] %v821
        %854 = vst [vmem:[%s217 + $0x8] sm:$0xff] %v822
        %855 = vst [vmem:[%s217 + $0x10] sm:$0xff] %v823
        %856 = vst [vmem:[%s217 + $0x18] sm:$0xff] %v824
        %857 = vst [vmem:[%s217 + $0x20] sm:$0xff] %v825
        %858 = vst [vmem:[%s217 + $0x28] sm:$0xff] %v826
        %859 = vst [vmem:[%s217 + $0x30] sm:$0xff] %v827
        %860 = vst [vmem:[%s217 + $0x38] sm:$0xff] %v828
        %861 = vst [vmem:[%s217 + $0x40] sm:$0xff] %v829
        %862 = vst [vmem:[%s217 + $0x48] sm:$0xff] %v830
        %863 = vst [vmem:[%s217 + $0x50] sm:$0xff] %v831
        %864 = vst [vmem:[%s217 + $0x58] sm:$0xff] %v832
        %865 = vst [vmem:[%s217 + $0x60] sm:$0xff] %v833
        %866 = vst [vmem:[%s217 + $0x68] sm:$0xff] %v834
        %867 = vst [vmem:[%s217 + $0x70] sm:$0xff] %v835
        %868 = vst [vmem:[%s217 + $0x78] sm:$0xff] %v836
        %869 = vst [vmem:[%s217 + $0x80] sm:$0xff] %v837
        %870 = vst [vmem:[%s217 + $0x88] sm:$0xff] %v838
        %871 = vst [vmem:[%s217 + $0x90] sm:$0xff] %v839
        %872 = vst [vmem:[%s217 + $0x98] sm:$0xff] %v840
        %873 = vst [vmem:[%s217 + $0xa0] sm:$0xff] %v841
        %874 = vst [vmem:[%s217 + $0xa8] sm:$0xff] %v842
        %875 = vst [vmem:[%s217 + $0xb0] sm:$0xff] %v843
        %876 = vst [vmem:[%s217 + $0xb8] sm:$0xff] %v844
        %877 = vst [vmem:[%s217 + $0xc0] sm:$0xff] %v845
        %878 = vst [vmem:[%s217 + $0xc8] sm:$0xff] %v846
        %879 = vst [vmem:[%s217 + $0xd0] sm:$0xff] %v847
        %880 = vst [vmem:[%s217 + $0xd8] sm:$0xff] %v848
        %881 = vst [vmem:[%s217 + $0xe0] sm:$0xff] %v849
        %882 = vst [vmem:[%s217 + $0xe8] sm:$0xff] %v850
        %883 = vst [vmem:[%s217 + $0xf0] sm:$0xff] %v851
        %884 = vst [vmem:[%s217 + $0xf8] sm:$0xff] %v852
      $region40: #{conv2d_shift_forward.1} parent=31 // pred_fallthru
        _
      %s885 = smul.u32 32, %s18
      %p886 = scmp.lt.s32.totalorder %s885, 63
      %s887 = scalar_select %p886, %s885, 63
      %s888 = smul.addr %s887, 8
      %s889 = scalar_lea.vmem %s3, %s888
      // Predicated region
      $region41: #{conv2d_shift_forward.1} parent=31 // pred_check
        %p890 = pneg %p119
      $region42: #{conv2d_shift_forward.1} parent=31 // pred_check_branch
        %892 = sbr.rel (%p890) target = $region44
      $region43: #{conv2d_shift_forward.1} parent=31 // pred_region
        %s893 = smul.u32 32, %s18
      $region44: #{conv2d_shift_forward.1} parent=31 // pred_fallthru
        _
    $region32: #{conv2d_shift_forward.1} parent=5 // pred_fallthru
      _
    %p894 = scmp.le.s32.totalorder 2, %s9
    // Predicated region
    $region45: #{conv2d_shift_forward.1} parent=5 // pred_check
      %p895 = pneg %p894
    $region46: #{conv2d_shift_forward.1} parent=5 // pred_check_branch
      %897 = sbr.rel (%p895) target = $region48
    $region47: #{conv2d_shift_forward.1} parent=5 // pred_region
      %s898 = ssub.s32 %s9, 2
      // Predicated region
      $region49: #{conv2d_shift_forward.1} parent=47 // pred_check
        %p899 = pneg %p125
      $region50: #{conv2d_shift_forward.1} parent=47 // pred_check_branch
        %901 = sbr.rel (%p899) target = $region52
      $region51: #{conv2d_shift_forward.1} parent=47 // pred_region
        %s902 = smul.u32 32, %s20
        %p903 = scmp.lt.s32.totalorder %s902, 63
        %s904 = scalar_select %p903, %s902, 63
        %s905 = smul.addr %s904, 8
        %s906 = scalar_lea.vmem %s3, %s905
      $region52: #{conv2d_shift_forward.1} parent=47 // pred_fallthru
        _
    $region48: #{conv2d_shift_forward.1} parent=5 // pred_fallthru
      _
  $region6: #{conv2d_shift_forward.1} parent=0 // loop_footer
    %s13 = sadd.s32 1, %s9
  $region7: #{conv2d_shift_forward.1} parent=0 // loop_footer_branch
    %8 = sbr.rel target = $region3
  $region8: #{conv2d_shift_forward.1} parent=0 // loop_exit
    _

</llo_original>
